<compile_context>
chip_gen: v5e
topology: v5e:2x2
jax: 0.10.0
libtpu: 0.0.40
codegen_flags: <defaults>
</compile_context>

<pallas_src>
import functools

import jax
import jax.numpy as jnp
from jax.experimental import pallas as pl
from jax.experimental.pallas import tpu as pltpu


# ----------------------------- Pallas kernel -----------------------------

def _cbn_kernel(x_ref, c_ref, wg_ref, bg_ref, wb_ref, bb_ref, o_ref,
                sum_ref, sq_ref, gamma_ref, beta_ref,
                *, eps, norm, n_total, t_total):
    """Grid = (channel tiles, pass in {0: stats, 1: normalize}, time tiles)."""
    p = pl.program_id(1)
    t = pl.program_id(2)
    n_t = pl.num_programs(2)

    # --- once per channel tile: conditional affine params (1x1 conv == matmul),
    #     fused into a single (N, C) x (C, 2*TF) MXU push, plus stats init. ---
    @pl.when((p == 0) & (t == 0))
    def _():
        c = c_ref[...]                                                    # (N, C)
        w = jnp.concatenate([wg_ref[...], wb_ref[...]], axis=1)          # (C, 2*TF)
        b = jnp.concatenate([bg_ref[...], bb_ref[...]], axis=1)          # (1, 2*TF)
        gb = jnp.dot(c, w, preferred_element_type=jnp.float32) + b       # (N, 2*TF)
        tf_sz = gamma_ref.shape[1]
        gamma_ref[...] = gb[:, :tf_sz]
        beta_ref[...] = gb[:, tf_sz:]
        sum_ref[...] = jnp.zeros_like(sum_ref)
        sq_ref[...] = jnp.zeros_like(sq_ref)

    # --- pass 0: accumulate per-(sample, channel) sum / sum-of-squares over T ---
    @pl.when(p == 0)
    def _():
        x = x_ref[...].astype(jnp.float32)                                # (N, TF, TT)
        sum_ref[...] += jnp.sum(x, axis=2)
        sq_ref[...] += jnp.sum(x * x, axis=2)

    # --- end of pass 0: finalize mean / rstd (single-pass E[x^2] - mean^2 form).
    #     sum_ref is reused to hold mean, sq_ref to hold rstd. ---
    @pl.when((p == 0) & (t == n_t - 1))
    def _():
        if norm == "batch_norm":
            cnt = jnp.float32(n_total * t_total)
            s = jnp.sum(sum_ref[...], axis=0, keepdims=True)              # (1, TF)
            sq = jnp.sum(sq_ref[...], axis=0, keepdims=True)
            mean = s / cnt
            var = jnp.maximum(sq / cnt - mean * mean, 0.0)
            sum_ref[...] = jnp.broadcast_to(mean, sum_ref.shape)
            sq_ref[...] = jnp.broadcast_to(jax.lax.rsqrt(var + eps), sq_ref.shape)
        else:  # instance_norm: per-(sample, channel) stats over time only
            cnt = jnp.float32(t_total)
            mean = sum_ref[...] / cnt
            var = jnp.maximum(sq_ref[...] / cnt - mean * mean, 0.0)
            sum_ref[...] = mean
            sq_ref[...] = jax.lax.rsqrt(var + eps)

    # --- pass 1: normalize + conditional affine, output in the input dtype ---
    @pl.when(p == 1)
    def _():
        x = x_ref[...].astype(jnp.float32)
        mean = sum_ref[...][:, :, None]
        rstd = sq_ref[...][:, :, None]
        g = gamma_ref[...][:, :, None]
        b = beta_ref[...][:, :, None]
        o_ref[...] = (g * ((x - mean) * rstd) + b).astype(o_ref.dtype)


# ----------------------------- tiling / VMEM budget -----------------------------

def _vmem_budget():
    """Generation-aware (v5e/v6e: 128 MiB, v7x: 64 MiB) scoped-VMEM limit + tile budget."""
    cap = 64 << 20                                   # conservative (v7x-sized) fallback
    try:
        cap = int(pltpu.get_tpu_info().vmem_capacity_bytes)
    except Exception:
        pass
    limit = min(int(cap * 0.8), 110 << 20)           # scoped limit we request
    budget = (limit * 3) // 4                        # share usable by tiles + scratch
    return budget, limit


def _pick_tiles(N, F, T, C, itemsize, budget):
    """Pick (channel_tile, time_tile): divisors that are 128-multiples or the full dim.

    Residency is counted as 2x double-buffered input tile + 2x output tile +
    f32 scratch + weight blocks.  Prefers F//TF >= 2 (v7x megacore) for F >= 256,
    then the largest tile, then the most lane-dense time tile.  If nothing fits
    the budget, degrade to the smallest-footprint tiling (never blow VMEM).
    """
    def cands(dim):
        out = {dim}
        out.update(d for d in range(128, dim, 128) if dim % d == 0)
        return sorted(out)

    def footprint(tf, tt):
        io = 4 * N * tf * tt * itemsize              # 2x in + 2x out, double-buffered
        scr = 4 * N * tf * 4                          # sum / sumsq / gamma / beta (f32)
        wts = 2 * (2 * C * tf + 2 * tf + N * C) * 4   # weight / bias / code blocks
        return io + scr + wts + (1 << 20)             # + slack for compiler scratch

    pairs = [(tf, tt) for tf in cands(F) for tt in cands(T)]
    fitting = [pr for pr in pairs if footprint(*pr) <= budget]
    if fitting:
        def score(pr):
            tf, tt = pr
            shards = (F // tf) >= 2 or F < 256        # let v7x's 2 TCs split channels
            return (shards, N * tf * tt, tt)
        return max(fitting, key=score)
    return min(pairs, key=lambda pr: footprint(*pr))


# ----------------------------- wrapper -----------------------------

def cbatchnorm1d(x, c, wg, bg, wb, bb, *, norm_method="batch_norm", eps=1e-5,
                 channel_tile=None, time_tile=None):
    """x: (N, f_dim, T) any float dtype; c: (N, c_dim); wg/wb: (c_dim, f_dim); bg/bb: (f_dim,)."""
    N, F, T = x.shape
    Nc, C = c.shape
    assert N == Nc, "x.size(0) == c.size(0)"
    assert wg.shape == (C, F) and wb.shape == (C, F)
    assert bg.shape == (F,) and bb.shape == (F,)
    if norm_method not in ("batch_norm", "instance_norm"):
        # TODO(synk): group_norm / layer_norm branches of the module are not implemented.
        raise ValueError(f"unsupported norm_method: {norm_method}")

    budget, vmem_limit = _vmem_budget()
    TF, TT = _pick_tiles(N, F, T, C, jnp.dtype(x.dtype).itemsize, budget)
    if channel_tile is not None:
        TF = channel_tile
    if time_tile is not None:
        TT = time_tile
    assert F % TF == 0 and T % TT == 0

    grid = (F // TF, 2, T // TT)   # (channel tiles, {stats, normalize} pass, time tiles)

    kernel = functools.partial(_cbn_kernel, eps=float(eps), norm=norm_method,
                               n_total=N, t_total=T)
    f32 = jnp.float32
    return pl.pallas_call(
        kernel,
        out_shape=jax.ShapeDtypeStruct((N, F, T), x.dtype),      # native-dtype output
        grid=grid,
        in_specs=[
            pl.BlockSpec((N, TF, TT), lambda f, p, t: (0, f, t)),   # x tile (native dtype)
            pl.BlockSpec((N, C), lambda f, p, t: (0, 0)),           # conditioning code
            pl.BlockSpec((C, TF), lambda f, p, t: (0, f)),          # gamma conv weight
            pl.BlockSpec((1, TF), lambda f, p, t: (0, f)),          # gamma conv bias
            pl.BlockSpec((C, TF), lambda f, p, t: (0, f)),          # beta conv weight
            pl.BlockSpec((1, TF), lambda f, p, t: (0, f)),          # beta conv bias
        ],
        # All pass-0 steps map to the same output block, so the only HBM writebacks
        # are the fully-written pass-1 tiles (no garbage / duplicate writes).
        out_specs=pl.BlockSpec((N, TF, TT), lambda f, p, t: (0, f, t * p)),
        scratch_shapes=[
            pltpu.VMEM((N, TF), f32),   # running sum  -> mean
            pltpu.VMEM((N, TF), f32),   # running sumsq -> rstd
            pltpu.VMEM((N, TF), f32),   # gamma (per sample, per channel)
            pltpu.VMEM((N, TF), f32),   # beta
        ],
        compiler_params=pltpu.CompilerParams(
            dimension_semantics=("parallel", "arbitrary", "arbitrary"),
            vmem_limit_bytes=vmem_limit,
        ),
    )(
        x,                                # native dtype (bf16 or f32) — no wrapper cast
        c.astype(f32),
        wg.astype(f32),
        bg.reshape(1, F).astype(f32),
        wb.astype(f32),
        bb.reshape(1, F).astype(f32),
    )


# ----------------------------- pure-JAX reference -----------------------------

def cbatchnorm1d_ref(x, c, wg, bg, wb, bb, norm_method="batch_norm", eps=1e-5):
    x = x.astype(jnp.float32)
    gamma = c @ wg + bg                                   # (N, F)
    beta = c @ wb + bb                                    # (N, F)
    if norm_method == "batch_norm":
        mean = x.mean(axis=(0, 2), keepdims=True)
        var = ((x - mean) ** 2).mean(axis=(0, 2), keepdims=True)
    elif norm_method == "instance_norm":
        mean = x.mean(axis=2, keepdims=True)
        var = ((x - mean) ** 2).mean(axis=2, keepdims=True)
    else:
        raise ValueError(norm_method)
    net = (x - mean) / jnp.sqrt(var + eps)
    return gamma[:, :, None] * net + beta[:, :, None]


# ----------------------------- parameter init -----------------------------

def init_cbn_params_reset(c_dim, f_dim):
    """Matches CBatchNorm1d.reset_parameters(): W=0, gamma bias=1, beta bias=0."""
    return dict(
        wg=jnp.zeros((c_dim, f_dim), jnp.float32),
        bg=jnp.ones((f_dim,), jnp.float32),
        wb=jnp.zeros((c_dim, f_dim), jnp.float32),
        bb=jnp.zeros((f_dim,), jnp.float32),
    )


def init_cbn_params_random(key, c_dim, f_dim, scale=0.1):
    k1, k2, k3, k4 = jax.random.split(key, 4)
    return dict(
        wg=scale * jax.random.normal(k1, (c_dim, f_dim), jnp.float32),
        bg=1.0 + scale * jax.random.normal(k2, (f_dim,), jnp.float32),
        wb=scale * jax.random.normal(k3, (c_dim, f_dim), jnp.float32),
        bb=scale * jax.random.normal(k4, (f_dim,), jnp.float32),
    )


# ----------------------------- main -----------------------------

if __name__ == "__main__":
    key = jax.random.PRNGKey(0)
    kx, kc, kp, kx2, kc2 = jax.random.split(key, 5)

    def run(xv, cv, prm, norm, **kw):
        fn = jax.jit(functools.partial(cbatchnorm1d, norm_method=norm, **kw))
        out = fn(xv, cv, prm["wg"], prm["bg"], prm["wb"], prm["bb"])
        jax.block_until_ready(out)
        return out

    # --- small demo shapes consistent with the module ---
    N, c_dim, f_dim, T = 2, 4, 32, 16
    x = jax.random.normal(kx, (N, f_dim, T), jnp.float32)
    c = jax.random.normal(kc, (N, c_dim), jnp.float32)
    params_reset = init_cbn_params_reset(c_dim, f_dim)
    params_rand = init_cbn_params_random(kp, c_dim, f_dim)

    # 1) module's reset_parameters() init (gamma==1, beta==0 path), batch_norm
    # 2) random conv weights, batch_norm
    # 3) random conv weights, instance_norm
    for prm, norm in ((params_reset, "batch_norm"),
                      (params_rand, "batch_norm"),
                      (params_rand, "instance_norm")):
        out = run(x, c, prm, norm)
        ref = cbatchnorm1d_ref(x, c, prm["wg"], prm["bg"], prm["wb"], prm["bb"],
                               norm_method=norm)
        assert out.shape == x.shape and out.dtype == x.dtype
        err = float(jnp.max(jnp.abs(out - ref)))
        assert jnp.allclose(out, ref, atol=1e-3, rtol=1e-3), f"{norm}: max abs err {err}"

    # 4) native bf16 I/O (half the HBM traffic), f32 stats math inside the kernel
    x_bf16 = x.astype(jnp.bfloat16)
    out = run(x_bf16, c, params_rand, "batch_norm")
    ref = cbatchnorm1d_ref(x_bf16, c, params_rand["wg"], params_rand["bg"],
                           params_rand["wb"], params_rand["bb"])
    assert out.dtype == jnp.bfloat16
    assert jnp.allclose(out.astype(jnp.float32), ref, atol=5e-2, rtol=5e-2)

    # 5) multi-tile path: channel + time tiling, stats accumulated across T tiles
    N2, F2, T2 = 4, 256, 256
    x2 = jax.random.normal(kx2, (N2, F2, T2), jnp.float32)
    c2 = jax.random.normal(kc2, (N2, c_dim), jnp.float32)
    prm2 = init_cbn_params_random(kp, c_dim, F2)
    out2 = run(x2, c2, prm2, "batch_norm", channel_tile=128, time_tile=128)
    ref2 = cbatchnorm1d_ref(x2, c2, prm2["wg"], prm2["bg"], prm2["wb"], prm2["bb"])
    err2 = float(jnp.max(jnp.abs(out2 - ref2)))
    assert jnp.allclose(out2, ref2, atol=1e-3, rtol=1e-3), f"tiled: max abs err {err2}"

    print("KERNEL_OK")
</pallas_src>

<mosaic_0001>
module attributes {stable_mosaic.version = 11 : i64} {
  func.func @_cbn_kernel(%arg0: i32, %arg1: i32, %arg2: i32, %arg3: memref<2x32x16xf32, #tpu.memory_space<vmem>>, %arg4: memref<2x4xf32, #tpu.memory_space<vmem>>, %arg5: memref<4x32xf32, #tpu.memory_space<vmem>>, %arg6: memref<1x32xf32, #tpu.memory_space<vmem>>, %arg7: memref<4x32xf32, #tpu.memory_space<vmem>>, %arg8: memref<1x32xf32, #tpu.memory_space<vmem>>, %arg9: memref<2x32x16xf32, #tpu.memory_space<vmem>>, %arg10: memref<2x32xf32, #tpu.memory_space<vmem>>, %arg11: memref<2x32xf32, #tpu.memory_space<vmem>>, %arg12: memref<2x32xf32, #tpu.memory_space<vmem>>, %arg13: memref<2x32xf32, #tpu.memory_space<vmem>>) attributes {dimension_semantics = [#tpu.dimension_semantics<parallel>, #tpu.dimension_semantics<arbitrary>, #tpu.dimension_semantics<arbitrary>], iteration_bounds = array<i64: 1, 2, 1>, scalar_prefetch = 0 : i64, scratch_operands = 4 : i64, tpu.core_type = #tpu.core_type<tc>, window_params = [{transform_indices = @transform_0, window_bounds = array<i64: 2, 32, 16>}, {pipeline_mode = #tpu.pipeline_mode<synchronous>, transform_indices = @transform_1, window_bounds = array<i64: 2, 4>}, {transform_indices = @transform_2, window_bounds = array<i64: 4, 32>}, {transform_indices = @transform_3, window_bounds = array<i64: 1, 32>}, {transform_indices = @transform_4, window_bounds = array<i64: 4, 32>}, {transform_indices = @transform_5, window_bounds = array<i64: 1, 32>}, {transform_indices = @transform_6, window_bounds = array<i64: 2, 32, 16>}]} {
    %c0_i32 = arith.constant 0 : i32
    %0 = arith.cmpi eq, %arg1, %c0_i32 : i32
    %c0_i32_0 = arith.constant 0 : i32
    %1 = arith.cmpi eq, %arg2, %c0_i32_0 : i32
    %2 = arith.andi %0, %1 : i1
    %3 = arith.extui %2 : i1 to i32
    %c0_i32_1 = arith.constant 0 : i32
    %4 = arith.cmpi ne, %3, %c0_i32_1 : i32
    scf.if %4 {
      %c0 = arith.constant 0 : index
      %c0_8 = arith.constant 0 : index
      %16 = vector.load %arg4[%c0, %c0_8] : memref<2x4xf32, #tpu.memory_space<vmem>>, vector<2x4xf32>
      %c0_9 = arith.constant 0 : index
      %c0_10 = arith.constant 0 : index
      %17 = vector.load %arg5[%c0_9, %c0_10] : memref<4x32xf32, #tpu.memory_space<vmem>>, vector<4x32xf32>
      %c0_11 = arith.constant 0 : index
      %c0_12 = arith.constant 0 : index
      %18 = vector.load %arg7[%c0_11, %c0_12] : memref<4x32xf32, #tpu.memory_space<vmem>>, vector<4x32xf32>
      %19 = tpu.concatenate %17, %18 in 1 : vector<4x32xf32>, vector<4x32xf32> -> vector<4x64xf32>
      %c0_13 = arith.constant 0 : index
      %c0_14 = arith.constant 0 : index
      %20 = vector.load %arg6[%c0_13, %c0_14] : memref<1x32xf32, #tpu.memory_space<vmem>>, vector<1x32xf32>
      %c0_15 = arith.constant 0 : index
      %c0_16 = arith.constant 0 : index
      %21 = vector.load %arg8[%c0_15, %c0_16] : memref<1x32xf32, #tpu.memory_space<vmem>>, vector<1x32xf32>
      %22 = tpu.concatenate %20, %21 in 1 : vector<1x32xf32>, vector<1x32xf32> -> vector<1x64xf32>
      %cst = arith.constant dense<0.000000e+00> : vector<2x64xf32>
      %23 = tpu.matmul %16, %19, %cst {dimension_numbers = #tpu.dot_dimension_numbers<[1], [0], [0], [1], [0, 0, 1, 1], [], []>} : vector<2x4xf32>, vector<4x64xf32>, vector<2x64xf32> -> vector<2x64xf32>
      %24 = vector.broadcast %22 : vector<1x64xf32> to vector<2x64xf32>
      %25 = arith.addf %23, %24 : vector<2x64xf32>
      %26 = vector.extract_strided_slice %25 {offsets = [0, 0], sizes = [2, 32], strides = [1, 1]} : vector<2x64xf32> to vector<2x32xf32>
      %c0_17 = arith.constant 0 : index
      %c0_18 = arith.constant 0 : index
      %27 = vector.load %arg12[%c0_17, %c0_18] : memref<2x32xf32, #tpu.memory_space<vmem>>, vector<2x32xf32>
      tpu.vector_store %arg12[%c0_17, %c0_18], %26 {strides = array<i32>} : memref<2x32xf32, #tpu.memory_space<vmem>>, vector<2x32xf32>,
      %28 = vector.extract_strided_slice %25 {offsets = [0, 32], sizes = [2, 32], strides = [1, 1]} : vector<2x64xf32> to vector<2x32xf32>
      %c0_19 = arith.constant 0 : index
      %c0_20 = arith.constant 0 : index
      %29 = vector.load %arg13[%c0_19, %c0_20] : memref<2x32xf32, #tpu.memory_space<vmem>>, vector<2x32xf32>
      tpu.vector_store %arg13[%c0_19, %c0_20], %28 {strides = array<i32>} : memref<2x32xf32, #tpu.memory_space<vmem>>, vector<2x32xf32>,
      %cst_21 = arith.constant 0.000000e+00 : f32
      %30 = vector.broadcast %cst_21 : f32 to vector<2x32xf32>
      %c0_22 = arith.constant 0 : index
      %c0_23 = arith.constant 0 : index
      %31 = vector.load %arg10[%c0_22, %c0_23] : memref<2x32xf32, #tpu.memory_space<vmem>>, vector<2x32xf32>
      tpu.vector_store %arg10[%c0_22, %c0_23], %30 {strides = array<i32>} : memref<2x32xf32, #tpu.memory_space<vmem>>, vector<2x32xf32>,
      %cst_24 = arith.constant 0.000000e+00 : f32
      %32 = vector.broadcast %cst_24 : f32 to vector<2x32xf32>
      %c0_25 = arith.constant 0 : index
      %c0_26 = arith.constant 0 : index
      %33 = vector.load %arg11[%c0_25, %c0_26] : memref<2x32xf32, #tpu.memory_space<vmem>>, vector<2x32xf32>
      tpu.vector_store %arg11[%c0_25, %c0_26], %32 {strides = array<i32>} : memref<2x32xf32, #tpu.memory_space<vmem>>, vector<2x32xf32>,
    } else {
    }
    %c0_i32_2 = arith.constant 0 : i32
    %5 = arith.cmpi eq, %arg1, %c0_i32_2 : i32
    %6 = arith.extui %5 : i1 to i32
    %c0_i32_3 = arith.constant 0 : i32
    %7 = arith.cmpi ne, %6, %c0_i32_3 : i32
    scf.if %7 {
      %c0 = arith.constant 0 : index
      %c0_8 = arith.constant 0 : index
      %c0_9 = arith.constant 0 : index
      %16 = vector.load %arg3[%c0, %c0_8, %c0_9] : memref<2x32x16xf32, #tpu.memory_space<vmem>>, vector<2x32x16xf32>
      %c0_10 = arith.constant 0 : index
      %c0_11 = arith.constant 0 : index
      %17 = vector.load %arg10[%c0_10, %c0_11] : memref<2x32xf32, #tpu.memory_space<vmem>>, vector<2x32xf32>
      %cst = arith.constant dense<0.000000e+00> : vector<2x32xf32>
      %18 = vector.multi_reduction <add>, %16, %cst [2] : vector<2x32x16xf32> to vector<2x32xf32>
      %19 = arith.addf %17, %18 : vector<2x32xf32>
      %c0_12 = arith.constant 0 : index
      %c0_13 = arith.constant 0 : index
      %20 = vector.load %arg10[%c0_12, %c0_13] : memref<2x32xf32, #tpu.memory_space<vmem>>, vector<2x32xf32>
      tpu.vector_store %arg10[%c0_12, %c0_13], %19 {strides = array<i32>} : memref<2x32xf32, #tpu.memory_space<vmem>>, vector<2x32xf32>,
      %c0_14 = arith.constant 0 : index
      %c0_15 = arith.constant 0 : index
      %21 = vector.load %arg11[%c0_14, %c0_15] : memref<2x32xf32, #tpu.memory_space<vmem>>, vector<2x32xf32>
      %22 = arith.mulf %16, %16 : vector<2x32x16xf32>
      %cst_16 = arith.constant dense<0.000000e+00> : vector<2x32xf32>
      %23 = vector.multi_reduction <add>, %22, %cst_16 [2] : vector<2x32x16xf32> to vector<2x32xf32>
      %24 = arith.addf %21, %23 : vector<2x32xf32>
      %c0_17 = arith.constant 0 : index
      %c0_18 = arith.constant 0 : index
      %25 = vector.load %arg11[%c0_17, %c0_18] : memref<2x32xf32, #tpu.memory_space<vmem>>, vector<2x32xf32>
      tpu.vector_store %arg11[%c0_17, %c0_18], %24 {strides = array<i32>} : memref<2x32xf32, #tpu.memory_space<vmem>>, vector<2x32xf32>,
    } else {
    }
    %c0_i32_4 = arith.constant 0 : i32
    %8 = arith.cmpi eq, %arg1, %c0_i32_4 : i32
    %c0_i32_5 = arith.constant 0 : i32
    %9 = arith.cmpi eq, %arg2, %c0_i32_5 : i32
    %10 = arith.andi %8, %9 : i1
    %11 = arith.extui %10 : i1 to i32
    %c0_i32_6 = arith.constant 0 : i32
    %12 = arith.cmpi ne, %11, %c0_i32_6 : i32
    scf.if %12 {
      %c0 = arith.constant 0 : index
      %c0_8 = arith.constant 0 : index
      %16 = vector.load %arg10[%c0, %c0_8] : memref<2x32xf32, #tpu.memory_space<vmem>>, vector<2x32xf32>
      %cst = arith.constant dense<0.000000e+00> : vector<32xf32>
      %17 = vector.multi_reduction <add>, %16, %cst [0] : vector<2x32xf32> to vector<32xf32>
      %18 = vector.shape_cast %17 : vector<32xf32> to vector<1x32xf32>
      %c0_9 = arith.constant 0 : index
      %c0_10 = arith.constant 0 : index
      %19 = vector.load %arg11[%c0_9, %c0_10] : memref<2x32xf32, #tpu.memory_space<vmem>>, vector<2x32xf32>
      %cst_11 = arith.constant dense<0.000000e+00> : vector<32xf32>
      %20 = vector.multi_reduction <add>, %19, %cst_11 [0] : vector<2x32xf32> to vector<32xf32>
      %21 = vector.shape_cast %20 : vector<32xf32> to vector<1x32xf32>
      %cst_12 = arith.constant 3.200000e+01 : f32
      %22 = vector.broadcast %cst_12 : f32 to vector<1x32xf32>
      %23 = arith.divf %18, %22 : vector<1x32xf32>
      %cst_13 = arith.constant 3.200000e+01 : f32
      %24 = vector.broadcast %cst_13 : f32 to vector<1x32xf32>
      %25 = arith.divf %21, %24 : vector<1x32xf32>
      %26 = arith.mulf %23, %23 : vector<1x32xf32>
      %27 = arith.subf %25, %26 : vector<1x32xf32>
      %cst_14 = arith.constant 0.000000e+00 : f32
      %28 = vector.broadcast %cst_14 : f32 to vector<1x32xf32>
      %29 = arith.maximumf %27, %28 : vector<1x32xf32>
      %30 = vector.shape_cast %23 : vector<1x32xf32> to vector<1x32xf32>
      %31 = vector.broadcast %30 : vector<1x32xf32> to vector<2x32xf32>
      %c0_15 = arith.constant 0 : index
      %c0_16 = arith.constant 0 : index
      %32 = vector.load %arg10[%c0_15, %c0_16] : memref<2x32xf32, #tpu.memory_space<vmem>>, vector<2x32xf32>
      tpu.vector_store %arg10[%c0_15, %c0_16], %31 {strides = array<i32>} : memref<2x32xf32, #tpu.memory_space<vmem>>, vector<2x32xf32>,
      %cst_17 = arith.constant 9.99999974E-6 : f32
      %33 = vector.broadcast %cst_17 : f32 to vector<1x32xf32>
      %34 = arith.addf %29, %33 : vector<1x32xf32>
      %35 = math.rsqrt %34 : vector<1x32xf32>
      %36 = vector.shape_cast %35 : vector<1x32xf32> to vector<1x32xf32>
      %37 = vector.broadcast %36 : vector<1x32xf32> to vector<2x32xf32>
      %c0_18 = arith.constant 0 : index
      %c0_19 = arith.constant 0 : index
      %38 = vector.load %arg11[%c0_18, %c0_19] : memref<2x32xf32, #tpu.memory_space<vmem>>, vector<2x32xf32>
      tpu.vector_store %arg11[%c0_18, %c0_19], %37 {strides = array<i32>} : memref<2x32xf32, #tpu.memory_space<vmem>>, vector<2x32xf32>,
    } else {
    }
    %c1_i32 = arith.constant 1 : i32
    %13 = arith.cmpi eq, %arg1, %c1_i32 : i32
    %14 = arith.extui %13 : i1 to i32
    %c0_i32_7 = arith.constant 0 : i32
    %15 = arith.cmpi ne, %14, %c0_i32_7 : i32
    scf.if %15 {
      %c0 = arith.constant 0 : index
      %c0_8 = arith.constant 0 : index
      %c0_9 = arith.constant 0 : index
      %16 = vector.load %arg3[%c0, %c0_8, %c0_9] : memref<2x32x16xf32, #tpu.memory_space<vmem>>, vector<2x32x16xf32>
      %c0_10 = arith.constant 0 : index
      %c0_11 = arith.constant 0 : index
      %17 = vector.load %arg10[%c0_10, %c0_11] : memref<2x32xf32, #tpu.memory_space<vmem>>, vector<2x32xf32>
      %18 = vector.shape_cast %17 : vector<2x32xf32> to vector<2x32x1xf32>
      %c0_12 = arith.constant 0 : index
      %c0_13 = arith.constant 0 : index
      %19 = vector.load %arg11[%c0_12, %c0_13] : memref<2x32xf32, #tpu.memory_space<vmem>>, vector<2x32xf32>
      %20 = vector.shape_cast %19 : vector<2x32xf32> to vector<2x32x1xf32>
      %c0_14 = arith.constant 0 : index
      %c0_15 = arith.constant 0 : index
      %21 = vector.load %arg12[%c0_14, %c0_15] : memref<2x32xf32, #tpu.memory_space<vmem>>, vector<2x32xf32>
      %22 = vector.shape_cast %21 : vector<2x32xf32> to vector<2x32x1xf32>
      %c0_16 = arith.constant 0 : index
      %c0_17 = arith.constant 0 : index
      %23 = vector.load %arg13[%c0_16, %c0_17] : memref<2x32xf32, #tpu.memory_space<vmem>>, vector<2x32xf32>
      %24 = vector.shape_cast %23 : vector<2x32xf32> to vector<2x32x1xf32>
      %25 = vector.broadcast %18 : vector<2x32x1xf32> to vector<2x32x16xf32>
      %26 = arith.subf %16, %25 : vector<2x32x16xf32>
      %27 = vector.broadcast %20 : vector<2x32x1xf32> to vector<2x32x16xf32>
      %28 = arith.mulf %26, %27 : vector<2x32x16xf32>
      %29 = vector.broadcast %22 : vector<2x32x1xf32> to vector<2x32x16xf32>
      %30 = arith.mulf %29, %28 : vector<2x32x16xf32>
      %31 = vector.broadcast %24 : vector<2x32x1xf32> to vector<2x32x16xf32>
      %32 = arith.addf %30, %31 : vector<2x32x16xf32>
      %c0_18 = arith.constant 0 : index
      %c0_19 = arith.constant 0 : index
      %c0_20 = arith.constant 0 : index
      %33 = vector.load %arg9[%c0_18, %c0_19, %c0_20] : memref<2x32x16xf32, #tpu.memory_space<vmem>>, vector<2x32x16xf32>
      tpu.vector_store %arg9[%c0_18, %c0_19, %c0_20], %32 {strides = array<i32>} : memref<2x32x16xf32, #tpu.memory_space<vmem>>, vector<2x32x16xf32>,
    } else {
    }
    return
  }
  func.func @transform_0(%arg0: i32, %arg1: i32, %arg2: i32) -> (i32, i32, i32) {
    %c0_i32 = arith.constant 0 : i32
    %c0_i32_0 = arith.constant 0 : i32
    return %c0_i32, %arg0, %arg2 : i32, i32, i32
  }
  func.func @transform_1(%arg0: i32, %arg1: i32, %arg2: i32) -> (i32, i32) {
    %c0_i32 = arith.constant 0 : i32
    %c0_i32_0 = arith.constant 0 : i32
    %c0_i32_1 = arith.constant 0 : i32
    return %c0_i32, %c0_i32_0 : i32, i32
  }
  func.func @transform_2(%arg0: i32, %arg1: i32, %arg2: i32) -> (i32, i32) {
    %c0_i32 = arith.constant 0 : i32
    %c0_i32_0 = arith.constant 0 : i32
    return %c0_i32, %arg0 : i32, i32
  }
  func.func @transform_3(%arg0: i32, %arg1: i32, %arg2: i32) -> (i32, i32) {
    %c0_i32 = arith.constant 0 : i32
    %c0_i32_0 = arith.constant 0 : i32
    return %c0_i32, %arg0 : i32, i32
  }
  func.func @transform_4(%arg0: i32, %arg1: i32, %arg2: i32) -> (i32, i32) {
    %c0_i32 = arith.constant 0 : i32
    %c0_i32_0 = arith.constant 0 : i32
    return %c0_i32, %arg0 : i32, i32
  }
  func.func @transform_5(%arg0: i32, %arg1: i32, %arg2: i32) -> (i32, i32) {
    %c0_i32 = arith.constant 0 : i32
    %c0_i32_0 = arith.constant 0 : i32
    return %c0_i32, %arg0 : i32, i32
  }
  func.func @transform_6(%arg0: i32, %arg1: i32, %arg2: i32) -> (i32, i32, i32) {
    %0 = arith.muli %arg2, %arg1 : i32
    %c0_i32 = arith.constant 0 : i32
    %c0_i32_0 = arith.constant 0 : i32
    return %c0_i32, %arg0, %0 : i32, i32, i32
  }
}

</mosaic_0001>

<llo_original>
// kernel: cbatchnorm1d.1
$region0: #{cbatchnorm1d.1}
  #allocation0 [shape = 'u32[]', space=smem, size = 0x4, offset = 0x4, fixed_abs, tag = 'smem constant byte address 0x4 - core index']
  #allocation1 [shape = 'u32[72,128]{1,0:T(1,128)}', space=vmem, size = 0x9000, scoped, tag = 'internal scratch']
  #allocation2 [shape = 'f32[2,32]{1,0:T(2,128)}', space=vmem, size = 0x400, scoped, tag = 'scratch operand']
  #allocation3 [shape = 'f32[2,32]{1,0:T(2,128)}', space=vmem, size = 0x400, scoped, tag = 'scratch operand']
  #allocation4 [shape = 'f32[2,32]{1,0:T(2,128)}', space=vmem, size = 0x400, scoped, tag = 'scratch operand']
  #allocation5 [shape = 'f32[2,32]{1,0:T(2,128)}', space=vmem, size = 0x400, scoped, tag = 'scratch operand']
  %s0 = inlined_call_operand.vmem [shape: f32[2,32,16], index: 0, kind: input, shape index: {}]
  %s1 = inlined_call_operand.vmem [shape: f32[2,4], index: 1, kind: input, shape index: {}]
  %s2 = inlined_call_operand.vmem [shape: f32[4,32], index: 2, kind: input, shape index: {}]
  %s3 = inlined_call_operand.vmem [shape: f32[1,32], index: 3, kind: input, shape index: {}]
  %s4 = inlined_call_operand.vmem [shape: f32[4,32], index: 4, kind: input, shape index: {}]
  %s5 = inlined_call_operand.vmem [shape: f32[1,32], index: 5, kind: input, shape index: {}]
  %s6 = inlined_call_operand.vmem [shape: f32[2,32,16], index: 6, kind: output, shape index: {}]
  %s7 = sld [smem:[#allocation0]]
  $region73: #{cbatchnorm1d.1} parent=0
    _
  %s9 = ssub.s32 1, %s7
  %s10 = scalar_select 0, %s9, %s7
  loop: start=0, step=1, limit=4
  $region2: #{cbatchnorm1d.1} parent=0 // loop_pre_header
    _
  $region3: #{cbatchnorm1d.1} parent=0 // loop_header
    %s12 = sphi 0, %s16
    %p13 = scmp.ge.s32.totalorder %s12, 4
    %s19 = sphi 0, %s38
    %s20 = sphi 0, %s34
    %s21 = sphi 0, %s30
    %s22 = sphi 0, %s19
    %s23 = sphi 0, %s20
    %s24 = sphi 0, %s21
    %s25 = sphi 0, %s22
    %s26 = sphi 0, %s23
    %s27 = sphi 0, %s24
    %s43 = sphi 0, %s45
    %s46 = sphi 0, %s43
    %s47 = sphi 0, %s46
    %s63 = sphi 0, %s47
    %s67 = sphi 0, %s67
    %s69 = sphi 0, %s67
    %s70 = sphi 0, %s69
    %s84 = sphi 0, %s70
    %s90 = sphi 0, %s92
    %s93 = sphi 0, %s90
    %s94 = sphi 0, %s93
    %s110 = sphi 0, %s94
    %s116 = sphi 0, %s118
    %s119 = sphi 0, %s116
    %s120 = sphi 0, %s119
    %s136 = sphi 0, %s120
    %s142 = sphi 0, %s144
    %s145 = sphi 0, %s142
    %s146 = sphi 0, %s145
    %s162 = sphi 0, %s146
    %s168 = sphi 0, %s170
    %s171 = sphi 0, %s168
    %s172 = sphi 0, %s171
    %s188 = sphi 0, %s172
    %s198 = sphi 0, %s200
    %s201 = sphi 0, %s198
    %s202 = sphi 0, %s201
    %s218 = sphi 0, %s202
  $region4: #{cbatchnorm1d.1} parent=0 // loop_header_branch
    %15 = sbr.rel (%p13) target = $region8
  $region5: #{cbatchnorm1d.1} parent=0 // loop_body
    %s17 = ssub.s32 %s12, 1
    %s18 = ssub.s32 %s12, 2
    %s28 = sadd.s32 1, %s21
    %p29 = scmp.ge.s32.totalorder %s28, 1
    %s30 = scalar_select %p29, 0, %s28
    %s31 = sadd.s32 1, %s20
    %s32 = scalar_select %p29, %s31, %s20
    %p33 = scmp.ge.s32.totalorder %s32, 2
    %s34 = scalar_select %p33, 0, %s32
    %s35 = sadd.s32 1, %s19
    %s36 = scalar_select %p33, %s35, %s19
    %p37 = scmp.ge.s32.totalorder %s36, 1
    %s38 = scalar_select %p37, 0, %s36
    %s39 = ssub.s32 %s19, %s38
    %s40 = ssub.s32 %s21, %s30
    %s41 = sor.u32 %s39, %s40
    %p42 = scmp.eq.s32.totalorder %s41, 0
    %s44 = sadd.s32 %s43, 1
    %s45 = scalar_select %p42, %s43, %s44
    %p48 = pneg %p42
    %p49 = scmp.eq.s32.totalorder %s12, 1
    %p50 = por %p48, %p49
    %p51 = scmp.ne.s32.totalorder %s43, %s46
    %p52 = scmp.eq.s32.totalorder %s12, 0
    %p53 = por %p51, %p52
    %p54 = scmp.ne.s32.totalorder %s43, %s46
    %p55 = scmp.eq.s32.totalorder %s17, 1
    %p56 = por %p54, %p55
    %p57 = scmp.ne.s32.totalorder %s46, %s47
    %p58 = scmp.eq.s32.totalorder %s17, 0
    %p59 = por %p57, %p58
    %p60 = scmp.ne.s32.totalorder %s46, %s47
    %p61 = scmp.eq.s32.totalorder %s18, 1
    %p62 = por %p60, %p61
    %p64 = scmp.ne.s32.totalorder %s47, %s63
    %p65 = scmp.eq.s32.totalorder %s18, 0
    %p66 = por %p64, %p65
    %s68 = sadd.s32 %s67, 1
    %p71 = scmp.eq.s32.totalorder %s12, 1
    %p72 = scmp.ne.s32.totalorder %s67, %s69
    %p73 = scmp.eq.s32.totalorder %s12, 0
    %p74 = por %p72, %p73
    %p75 = scmp.ne.s32.totalorder %s67, %s69
    %p76 = scmp.eq.s32.totalorder %s17, 1
    %p77 = por %p75, %p76
    %p78 = scmp.ne.s32.totalorder %s69, %s70
    %p79 = scmp.eq.s32.totalorder %s17, 0
    %p80 = por %p78, %p79
    %p81 = scmp.ne.s32.totalorder %s69, %s70
    %p82 = scmp.eq.s32.totalorder %s18, 1
    %p83 = por %p81, %p82
    %p85 = scmp.ne.s32.totalorder %s70, %s84
    %p86 = scmp.eq.s32.totalorder %s18, 0
    %p87 = por %p85, %p86
    %s88 = ssub.s32 %s19, %s38
    %p89 = scmp.eq.s32.totalorder %s88, 0
    %s91 = sadd.s32 %s90, 1
    %s92 = scalar_select %p89, %s90, %s91
    %p95 = pneg %p89
    %p96 = scmp.eq.s32.totalorder %s12, 1
    %p97 = por %p95, %p96
    %p98 = scmp.ne.s32.totalorder %s90, %s93
    %p99 = scmp.eq.s32.totalorder %s12, 0
    %p100 = por %p98, %p99
    %p101 = scmp.ne.s32.totalorder %s90, %s93
    %p102 = scmp.eq.s32.totalorder %s17, 1
    %p103 = por %p101, %p102
    %p104 = scmp.ne.s32.totalorder %s93, %s94
    %p105 = scmp.eq.s32.totalorder %s17, 0
    %p106 = por %p104, %p105
    %p107 = scmp.ne.s32.totalorder %s93, %s94
    %p108 = scmp.eq.s32.totalorder %s18, 1
    %p109 = por %p107, %p108
    %p111 = scmp.ne.s32.totalorder %s94, %s110
    %p112 = scmp.eq.s32.totalorder %s18, 0
    %p113 = por %p111, %p112
    %s114 = ssub.s32 %s19, %s38
    %p115 = scmp.eq.s32.totalorder %s114, 0
    %s117 = sadd.s32 %s116, 1
    %s118 = scalar_select %p115, %s116, %s117
    %p121 = pneg %p115
    %p122 = scmp.eq.s32.totalorder %s12, 1
    %p123 = por %p121, %p122
    %p124 = scmp.ne.s32.totalorder %s116, %s119
    %p125 = scmp.eq.s32.totalorder %s12, 0
    %p126 = por %p124, %p125
    %p127 = scmp.ne.s32.totalorder %s116, %s119
    %p128 = scmp.eq.s32.totalorder %s17, 1
    %p129 = por %p127, %p128
    %p130 = scmp.ne.s32.totalorder %s119, %s120
    %p131 = scmp.eq.s32.totalorder %s17, 0
    %p132 = por %p130, %p131
    %p133 = scmp.ne.s32.totalorder %s119, %s120
    %p134 = scmp.eq.s32.totalorder %s18, 1
    %p135 = por %p133, %p134
    %p137 = scmp.ne.s32.totalorder %s120, %s136
    %p138 = scmp.eq.s32.totalorder %s18, 0
    %p139 = por %p137, %p138
    %s140 = ssub.s32 %s19, %s38
    %p141 = scmp.eq.s32.totalorder %s140, 0
    %s143 = sadd.s32 %s142, 1
    %s144 = scalar_select %p141, %s142, %s143
    %p147 = pneg %p141
    %p148 = scmp.eq.s32.totalorder %s12, 1
    %p149 = por %p147, %p148
    %p150 = scmp.ne.s32.totalorder %s142, %s145
    %p151 = scmp.eq.s32.totalorder %s12, 0
    %p152 = por %p150, %p151
    %p153 = scmp.ne.s32.totalorder %s142, %s145
    %p154 = scmp.eq.s32.totalorder %s17, 1
    %p155 = por %p153, %p154
    %p156 = scmp.ne.s32.totalorder %s145, %s146
    %p157 = scmp.eq.s32.totalorder %s17, 0
    %p158 = por %p156, %p157
    %p159 = scmp.ne.s32.totalorder %s145, %s146
    %p160 = scmp.eq.s32.totalorder %s18, 1
    %p161 = por %p159, %p160
    %p163 = scmp.ne.s32.totalorder %s146, %s162
    %p164 = scmp.eq.s32.totalorder %s18, 0
    %p165 = por %p163, %p164
    %s166 = ssub.s32 %s19, %s38
    %p167 = scmp.eq.s32.totalorder %s166, 0
    %s169 = sadd.s32 %s168, 1
    %s170 = scalar_select %p167, %s168, %s169
    %p173 = pneg %p167
    %p174 = scmp.eq.s32.totalorder %s12, 1
    %p175 = por %p173, %p174
    %p176 = scmp.ne.s32.totalorder %s168, %s171
    %p177 = scmp.eq.s32.totalorder %s12, 0
    %p178 = por %p176, %p177
    %p179 = scmp.ne.s32.totalorder %s168, %s171
    %p180 = scmp.eq.s32.totalorder %s17, 1
    %p181 = por %p179, %p180
    %p182 = scmp.ne.s32.totalorder %s171, %s172
    %p183 = scmp.eq.s32.totalorder %s17, 0
    %p184 = por %p182, %p183
    %p185 = scmp.ne.s32.totalorder %s171, %s172
    %p186 = scmp.eq.s32.totalorder %s18, 1
    %p187 = por %p185, %p186
    %p189 = scmp.ne.s32.totalorder %s172, %s188
    %p190 = scmp.eq.s32.totalorder %s18, 0
    %p191 = por %p189, %p190
    %s192 = smul.u32 %s21, %s20
    %s193 = smul.u32 %s30, %s34
    %s194 = ssub.s32 %s19, %s38
    %s195 = ssub.s32 %s192, %s193
    %s196 = sor.u32 %s194, %s195
    %p197 = scmp.eq.s32.totalorder %s196, 0
    %s199 = sadd.s32 %s198, 1
    %s200 = scalar_select %p197, %s198, %s199
    %p203 = pneg %p197
    %p204 = scmp.eq.s32.totalorder %s12, 1
    %p205 = por %p203, %p204
    %p206 = scmp.ne.s32.totalorder %s198, %s201
    %p207 = scmp.eq.s32.totalorder %s12, 0
    %p208 = por %p206, %p207
    %p209 = scmp.ne.s32.totalorder %s198, %s201
    %p210 = scmp.eq.s32.totalorder %s17, 1
    %p211 = por %p209, %p210
    %p212 = scmp.ne.s32.totalorder %s201, %s202
    %p213 = scmp.eq.s32.totalorder %s17, 0
    %p214 = por %p212, %p213
    %p215 = scmp.ne.s32.totalorder %s201, %s202
    %p216 = scmp.eq.s32.totalorder %s18, 1
    %p217 = por %p215, %p216
    %p219 = scmp.ne.s32.totalorder %s202, %s218
    %p220 = scmp.eq.s32.totalorder %s18, 0
    %p221 = por %p219, %p220
    %p222 = scmp.le.s32.totalorder 1, %s12
    %p223 = scmp.lt.s32.totalorder %s12, 3
    %p224 = pnand %p222, %p223
    %p225 = pneg %p224
    // Predicated region
    $region9: #{cbatchnorm1d.1} parent=5 // pred_check
      _
    $region10: #{cbatchnorm1d.1} parent=5 // pred_check_branch
      %227 = sbr.rel (%p224) target = $region12
    $region11: #{cbatchnorm1d.1} parent=5 // pred_region
      %s228 = ssub.s32 %s12, 1
      // Predicated region
      $region13: #{cbatchnorm1d.1} parent=11 // pred_check
        %p229 = pneg %p59
      $region14: #{cbatchnorm1d.1} parent=11 // pred_check_branch
        %231 = sbr.rel (%p229) target = $region16
      $region15: #{cbatchnorm1d.1} parent=11 // pred_region
        %s232 = smul.u32 4, %s22
        %p233 = scmp.lt.s32.totalorder %s232, 3
        %s234 = scalar_select %p233, %s232, 3
        %p235 = scmp.lt.s32.totalorder %s24, 0
        %s236 = scalar_select %p235, %s24, 0
        %s237 = sadd.s32 %s236, %s234
        %s238 = smul.addr %s237, 8
        %s239 = scalar_lea.vmem %s0, %s238
        %s240 = smul.u32 4, %s22
      $region16: #{cbatchnorm1d.1} parent=11 // pred_fallthru
        _
      // Predicated region
      $region17: #{cbatchnorm1d.1} parent=11 // pred_check
        %p241 = pneg %p80
      $region18: #{cbatchnorm1d.1} parent=11 // pred_check_branch
        %243 = sbr.rel (%p241) target = $region20
      $region19: #{cbatchnorm1d.1} parent=11 // pred_region
        _
      $region20: #{cbatchnorm1d.1} parent=11 // pred_fallthru
        _
      // Predicated region
      $region21: #{cbatchnorm1d.1} parent=11 // pred_check
        %p244 = pneg %p106
      $region22: #{cbatchnorm1d.1} parent=11 // pred_check_branch
        %246 = sbr.rel (%p244) target = $region24
      $region23: #{cbatchnorm1d.1} parent=11 // pred_region
        %p247 = scmp.lt.s32.totalorder %s22, 0
        %s248 = scalar_select %p247, %s22, 0
        %s249 = smul.addr %s248, 4
        %s250 = scalar_lea.vmem %s2, %s249
      $region24: #{cbatchnorm1d.1} parent=11 // pred_fallthru
        _
      // Predicated region
      $region25: #{cbatchnorm1d.1} parent=11 // pred_check
        %p251 = pneg %p132
      $region26: #{cbatchnorm1d.1} parent=11 // pred_check_branch
        %253 = sbr.rel (%p251) target = $region28
      $region27: #{cbatchnorm1d.1} parent=11 // pred_region
        %p254 = scmp.lt.s32.totalorder %s22, 0
        %s255 = scalar_select %p254, %s22, 0
        %s256 = scalar_lea.vmem %s3, %s255
      $region28: #{cbatchnorm1d.1} parent=11 // pred_fallthru
        _
      // Predicated region
      $region29: #{cbatchnorm1d.1} parent=11 // pred_check
        %p257 = pneg %p158
      $region30: #{cbatchnorm1d.1} parent=11 // pred_check_branch
        %259 = sbr.rel (%p257) target = $region32
      $region31: #{cbatchnorm1d.1} parent=11 // pred_region
        %p260 = scmp.lt.s32.totalorder %s22, 0
        %s261 = scalar_select %p260, %s22, 0
        %s262 = smul.addr %s261, 4
        %s263 = scalar_lea.vmem %s4, %s262
      $region32: #{cbatchnorm1d.1} parent=11 // pred_fallthru
        _
      // Predicated region
      $region33: #{cbatchnorm1d.1} parent=11 // pred_check
        %p264 = pneg %p184
      $region34: #{cbatchnorm1d.1} parent=11 // pred_check_branch
        %266 = sbr.rel (%p264) target = $region36
      $region35: #{cbatchnorm1d.1} parent=11 // pred_region
        %p267 = scmp.lt.s32.totalorder %s22, 0
        %s268 = scalar_select %p267, %s22, 0
        %s269 = scalar_lea.vmem %s5, %s268
      $region36: #{cbatchnorm1d.1} parent=11 // pred_fallthru
        _
    $region12: #{cbatchnorm1d.1} parent=5 // pred_fallthru
      _
    %p270 = scmp.lt.s32.totalorder %s12, 2
    // Predicated region
    $region37: #{cbatchnorm1d.1} parent=5 // pred_check
      %p271 = pneg %p270
    $region38: #{cbatchnorm1d.1} parent=5 // pred_check_branch
      %273 = sbr.rel (%p271) target = $region40
    $region39: #{cbatchnorm1d.1} parent=5 // pred_region
      _
    $region40: #{cbatchnorm1d.1} parent=5 // pred_fallthru
      _
    %p274 = scmp.le.s32.totalorder 1, %s12
    %p275 = scmp.lt.s32.totalorder %s12, 3
    %p276 = pnand %p274, %p275
    %p277 = pneg %p276
    // Predicated region
    $region41: #{cbatchnorm1d.1} parent=5 // pred_check
      _
    $region42: #{cbatchnorm1d.1} parent=5 // pred_check_branch
      %279 = sbr.rel (%p276) target = $region44
    $region43: #{cbatchnorm1d.1} parent=5 // pred_region
      %s280 = ssub.s32 %s12, 1
      %s281 = smul.u32 4, %s22
      %p282 = scmp.lt.s32.totalorder %s281, 3
      %s283 = scalar_select %p282, %s281, 3
      %p284 = scmp.lt.s32.totalorder %s24, 0
      %s285 = scalar_select %p284, %s24, 0
      %s286 = sadd.s32 %s285, %s283
      %s287 = smul.addr %s286, 8
      %s288 = scalar_lea.vmem %s0, %s287
      %p289 = pneg %p59
      %p290 = pneg %p56
      %p291 = pneg %p80
      %p292 = pneg %p77
      %p293 = scmp.lt.s32.totalorder %s22, 0
      %s294 = scalar_select %p293, %s22, 0
      %s295 = smul.addr %s294, 4
      %s296 = scalar_lea.vmem %s2, %s295
      %p297 = pneg %p106
      %p298 = pneg %p103
      %p299 = scmp.lt.s32.totalorder %s22, 0
      %s300 = scalar_select %p299, %s22, 0
      %s301 = scalar_lea.vmem %s3, %s300
      %p302 = pneg %p132
      %p303 = pneg %p129
      %p304 = scmp.lt.s32.totalorder %s22, 0
      %s305 = scalar_select %p304, %s22, 0
      %s306 = smul.addr %s305, 4
      %s307 = scalar_lea.vmem %s4, %s306
      %p308 = pneg %p158
      %p309 = pneg %p155
      %p310 = scmp.lt.s32.totalorder %s22, 0
      %s311 = scalar_select %p310, %s22, 0
      %s312 = scalar_lea.vmem %s5, %s311
      %p313 = pneg %p184
      %p314 = pneg %p181
      %p315 = pneg %p214
      %p316 = pneg %p211
      %s317 = smul.u32 %s24, %s23
      %s318 = smul.u32 4, %s22
      %p319 = scmp.lt.s32.totalorder %s318, 3
      %s320 = scalar_select %p319, %s318, 3
      %p321 = scmp.lt.s32.totalorder %s317, 0
      %s322 = scalar_select %p321, %s317, 0
      %s323 = sadd.s32 %s322, %s320
      %s324 = smul.addr %s323, 8
      %s325 = scalar_lea.vmem %s6, %s324
      %s326 = smul.u32 4, %s22
      %p327 = scmp.lt.s32.totalorder %s326, 3
      %s328 = scalar_select %p327, %s326, 3
      %p329 = scmp.lt.s32.totalorder %s24, 0
      %s330 = scalar_select %p329, %s24, 0
      %s331 = sadd.s32 %s330, %s328
      %s332 = smul.addr %s331, 8
      %s333 = scalar_lea.vmem %s0, %s332
      %s334 = smul.u32 4, %s22
      %p335 = scmp.lt.s32.totalorder %s22, 0
      %s336 = scalar_select %p335, %s22, 0
      %s337 = smul.addr %s336, 4
      %s338 = scalar_lea.vmem %s2, %s337
      %p339 = scmp.lt.s32.totalorder %s22, 0
      %s340 = scalar_select %p339, %s22, 0
      %s341 = scalar_lea.vmem %s3, %s340
      %p342 = scmp.lt.s32.totalorder %s22, 0
      %s343 = scalar_select %p342, %s22, 0
      %s344 = smul.addr %s343, 4
      %s345 = scalar_lea.vmem %s4, %s344
      %p346 = scmp.lt.s32.totalorder %s22, 0
      %s347 = scalar_select %p346, %s22, 0
      %s348 = scalar_lea.vmem %s5, %s347
      %s349 = smul.u32 %s24, %s23
      %s350 = smul.u32 4, %s22
      %p351 = scmp.lt.s32.totalorder %s350, 3
      %s352 = scalar_select %p351, %s350, 3
      %p353 = scmp.lt.s32.totalorder %s349, 0
      %s354 = scalar_select %p353, %s349, 0
      %s355 = sadd.s32 %s354, %s352
      %s356 = smul.addr %s355, 8
      %s357 = scalar_lea.vmem %s6, %s356
      %s358 = smul.u32 %s24, %s23
      %s359 = smul.u32 4, %s22
      %p360 = scmp.eq.s32.totalorder %s23, 0
      %p361 = scmp.eq.s32.totalorder %s24, 0
      %p362 = pnand %p360, %p361
      %p363 = pneg %p362
      // Predicated region
      $region45: #{cbatchnorm1d.1} parent=43 // pred_check
        _
      $region46: #{cbatchnorm1d.1} parent=43 // pred_check_branch
        %365 = sbr.rel (%p362) target = $region48
      $region47: #{cbatchnorm1d.1} parent=43 // pred_region
        %v366 = vld [vmem:[%s1] sm:$0x3]
        %v367 = vld [vmem:[%s338] sm:$0xf]
        %v368 = vld [vmem:[%s345] sm:$0xf]
        %370 = vrot.lane.b32.xlu0 %v368, 32
        %v371 = vpop.permute.xlu0 %370
        %vm373 = vcmask 261120
        %v374 = vsel %vm373, %v367, %v371
        %v375 = vld [vmem:[%s341] sm:$0x1]
        %v376 = vld [vmem:[%s348] sm:$0x1]
        %v378 = vperm.slane %v376, 0
        %379 = vrot.lane.b32.xlu0 %v378, 32
        %v380 = vpop.permute.xlu0 %379
        %v382 = vsel %vm373, %v375, %v380
        %v383 = vperm.slane %v382, 0
        %vm384 = vcmask 31744
        %v386 = vsel %vm384, %v366, 0
        %vm388 = vcmask 1043456
        %v390 = vsel %vm388, %v374, 0
        %392 = vmatpush.msra.mxu0 0.0
        %393 = vmatpush.msra.mxu0 0.0
        %394 = vmatpush.msra.mxu0 0.0
        %395 = vmatpush.msra.mxu0 0.0
        %396 = vmatpush.msra.mxu0 0.0
        %397 = vmatpush.msra.mxu0 0.0
        %398 = vmatpush.msra.mxu0 0.0
        %399 = vmatpush.msra.mxu0 0.0
        %400 = vmatpush.msra.mxu0 0.0
        %401 = vmatpush.msra.mxu0 0.0
        %402 = vmatpush.msra.mxu0 0.0
        %403 = vmatpush.msra.mxu0 0.0
        %404 = vmatpush.msra.mxu0 0.0
        %405 = vmatpush.msra.mxu0 0.0
        %406 = vmatpush.msra.mxu0 0.0
        %407 = vmatpush.msra.mxu0 %v390
        %408 = vmatmul.f32.gmra.mxu0 %v386
        %v409 = vpop.f32.mrf.mxu0
        %v410 = vadd.f32 %v383, %v409
        %411 = vdwg.mxu0
        %vm412 = vcmask 254976
        %413 = vst.msk [vmem:[#allocation4] sm:$0x3] %vm412, %v410
        %415 = vrot.lane.b32.xlu0 %v410, 96
        %v416 = vpop.permute.xlu0 %415
        %418 = vst.msk [vmem:[#allocation5] sm:$0x3] %vm412, %v416
        %419 = vst.msk [vmem:[#allocation2] sm:$0x3] %vm412, 0.0
        %420 = vst.msk [vmem:[#allocation3] sm:$0x3] %vm412, 0.0
      $region48: #{cbatchnorm1d.1} parent=43 // pred_fallthru
        _
      // Predicated region
      $region49: #{cbatchnorm1d.1} parent=43 // pred_check
        %p421 = pneg %p360
      $region50: #{cbatchnorm1d.1} parent=43 // pred_check_branch
        %423 = sbr.rel (%p421) target = $region52
      $region51: #{cbatchnorm1d.1} parent=43 // pred_region
        %v424 = vld [vmem:[%s333] sm:$0xff]
        %v425 = vld [vmem:[%s333 + $0x8] sm:$0xff]
        %v426 = vld [vmem:[%s333 + $0x10] sm:$0xff]
        %v427 = vld [vmem:[%s333 + $0x18] sm:$0xff]
        %v428 = vld [vmem:[%s333 + $0x20] sm:$0xff]
        %v429 = vld [vmem:[%s333 + $0x28] sm:$0xff]
        %v430 = vld [vmem:[%s333 + $0x30] sm:$0xff]
        %v431 = vld [vmem:[%s333 + $0x38] sm:$0xff]
        %v432 = vld [vmem:[#allocation2] sm:$0x3]
        %vm433 = vcmask 130048
        %v434 = vsel %vm433, %v424, 0.0
        %435 = vadd.xlane.f32.xlu0 %v434
        %v436 = vpop.xlane.xlu0 %435
        %v437 = vsel %vm433, %v425, 0.0
        %438 = vadd.xlane.f32.xlu0 %v437
        %v439 = vpop.xlane.xlu0 %438
        %v440 = vsel %vm433, %v426, 0.0
        %441 = vadd.xlane.f32.xlu0 %v440
        %v442 = vpop.xlane.xlu0 %441
        %v443 = vsel %vm433, %v427, 0.0
        %444 = vadd.xlane.f32.xlu0 %v443
        %v445 = vpop.xlane.xlu0 %444
        %v446 = vsel %vm433, %v428, 0.0
        %447 = vadd.xlane.f32.xlu0 %v446
        %v448 = vpop.xlane.xlu0 %447
        %v449 = vsel %vm433, %v429, 0.0
        %450 = vadd.xlane.f32.xlu0 %v449
        %v451 = vpop.xlane.xlu0 %450
        %v452 = vsel %vm433, %v430, 0.0
        %453 = vadd.xlane.f32.xlu0 %v452
        %v454 = vpop.xlane.xlu0 %453
        %v455 = vsel %vm433, %v431, 0.0
        %456 = vadd.xlane.f32.xlu0 %v455
        %v457 = vpop.xlane.xlu0 %456
        %v466 = vlaneseq
        %v467 = vand.u32 %v466, 127
        %v468 = vperm.slane %v436, %v467
        %v469 = vadd.s32 %v467, 4294967288
        %v470 = vperm.slane %v439, %v469
        %vm471 = vcmask 130112
        %v472 = vsel %vm471, %v470, %v468
        %v473 = vadd.s32 %v467, 4294967280
        %v474 = vperm.slane %v442, %v473
        %vm475 = vcmask 195712
        %v476 = vsel %vm475, %v474, %v472
        %v477 = vadd.s32 %v467, 4294967272
        %v478 = vperm.slane %v445, %v477
        %vm479 = vcmask 261312
        %v480 = vsel %vm479, %v478, %v476
        %v481 = vperm.slane %v448, %v467
        %v482 = vperm.slane %v451, %v469
        %v483 = vsel %vm471, %v482, %v481
        %v484 = vperm.slane %v454, %v473
        %v485 = vsel %vm475, %v484, %v483
        %v486 = vperm.slane %v457, %v477
        %v487 = vsel %vm479, %v486, %v485
        %vm488 = vcmask 1041409
        %v489 = vsel %vm488, %v487, %v480
        %v491 = vadd.f32 %v432, %v489
        %vm492 = vcmask 254976
        %493 = vst.msk [vmem:[#allocation2] sm:$0x3] %vm492, %v491
        %v494 = vld [vmem:[#allocation3] sm:$0x3]
        %v495 = vmul.f32 %v424, %v424
        %v496 = vmul.f32 %v425, %v425
        %v497 = vmul.f32 %v426, %v426
        %v498 = vmul.f32 %v427, %v427
        %v499 = vmul.f32 %v428, %v428
        %v500 = vmul.f32 %v429, %v429
        %v501 = vmul.f32 %v430, %v430
        %v502 = vmul.f32 %v431, %v431
        %v503 = vsel %vm433, %v495, 0.0
        %504 = vadd.xlane.f32.xlu0 %v503
        %v505 = vpop.xlane.xlu0 %504
        %v506 = vsel %vm433, %v496, 0.0
        %507 = vadd.xlane.f32.xlu0 %v506
        %v508 = vpop.xlane.xlu0 %507
        %v509 = vsel %vm433, %v497, 0.0
        %510 = vadd.xlane.f32.xlu0 %v509
        %v511 = vpop.xlane.xlu0 %510
        %v512 = vsel %vm433, %v498, 0.0
        %513 = vadd.xlane.f32.xlu0 %v512
        %v514 = vpop.xlane.xlu0 %513
        %v515 = vsel %vm433, %v499, 0.0
        %516 = vadd.xlane.f32.xlu0 %v515
        %v517 = vpop.xlane.xlu0 %516
        %v518 = vsel %vm433, %v500, 0.0
        %519 = vadd.xlane.f32.xlu0 %v518
        %v520 = vpop.xlane.xlu0 %519
        %v521 = vsel %vm433, %v501, 0.0
        %522 = vadd.xlane.f32.xlu0 %v521
        %v523 = vpop.xlane.xlu0 %522
        %v524 = vsel %vm433, %v502, 0.0
        %525 = vadd.xlane.f32.xlu0 %v524
        %v526 = vpop.xlane.xlu0 %525
        %v535 = vperm.slane %v505, %v467
        %v536 = vperm.slane %v508, %v469
        %v537 = vsel %vm471, %v536, %v535
        %v538 = vperm.slane %v511, %v473
        %v539 = vsel %vm475, %v538, %v537
        %v540 = vperm.slane %v514, %v477
        %v541 = vsel %vm479, %v540, %v539
        %v542 = vperm.slane %v517, %v467
        %v543 = vperm.slane %v520, %v469
        %v544 = vsel %vm471, %v543, %v542
        %v545 = vperm.slane %v523, %v473
        %v546 = vsel %vm475, %v545, %v544
        %v547 = vperm.slane %v526, %v477
        %v548 = vsel %vm479, %v547, %v546
        %v549 = vsel %vm488, %v548, %v541
        %v551 = vadd.f32 %v494, %v549
        %552 = vst.msk [vmem:[#allocation3] sm:$0x3] %vm492, %v551
      $region52: #{cbatchnorm1d.1} parent=43 // pred_fallthru
        _
      // Predicated region
      $region53: #{cbatchnorm1d.1} parent=43 // pred_check
        _
      $region54: #{cbatchnorm1d.1} parent=43 // pred_check_branch
        %554 = sbr.rel (%p362) target = $region56
      $region55: #{cbatchnorm1d.1} parent=43 // pred_region
        %v555 = vld [vmem:[#allocation2] sm:$0x3]
        %vm556 = vcmask 254976
        %v557 = vsel %vm556, %v555, 0.0
        %v558 = vrot.slane %v557, 4
        %v559 = vadd.f32 %v557, %v558
        %v560 = vrot.slane %v559, 2
        %v561 = vadd.f32 %v559, %v560
        %v562 = vrot.slane %v561, 1
        %v563 = vadd.f32 %v561, %v562
        %v564 = vld [vmem:[#allocation3] sm:$0x3]
        %v565 = vsel %vm556, %v564, 0.0
        %v566 = vrot.slane %v565, 4
        %v567 = vadd.f32 %v565, %v566
        %v568 = vrot.slane %v567, 2
        %v569 = vadd.f32 %v567, %v568
        %v570 = vrot.slane %v569, 1
        %v571 = vadd.f32 %v569, %v570
        %v572 = vrcp.pop 32.0
        %v573 = vmul.f32 32.0, %v572
        %v574 = vsub.f32 1.0, %v573
        %v575 = vmul.f32 %v572, %v574
        %v576 = vadd.f32 %v572, %v575
        %vm577 = vweird.f32 %v572
        %v578 = vsel %vm577, %v572, %v576
        %v579 = vmul.f32 %v563, %v578
        %v580 = vmul.f32 %v571, %v578
        %v581 = vmul.f32 %v579, %v579
        %v582 = vsub.f32 %v580, %v581
        %v583 = vmax.f32 %v582, 0.0
        %584 = vst.msk [vmem:[#allocation2] sm:$0x3] %vm556, %v579
        %v585 = vadd.f32 %v583, 1e-05
        %v586 = vrsqrt.pop %v585
        %v587 = vmul.f32 %v586, %v585
        %v588 = vmul.f32 %v587, %v586
        %v589 = vmul.f32 0.5, %v588
        %v590 = vsub.f32 1.5, %v589
        %v591 = vmul.f32 %v586, %v590
        %vm592 = vweird.f32 %v585
        %vm593 = vweird.f32 %v586
        %vm594 = vmor %vm592, %vm593
        %v595 = vsel %vm594, %v586, %v591
        %596 = vst.msk [vmem:[#allocation3] sm:$0x3] %vm556, %v595
      $region56: #{cbatchnorm1d.1} parent=43 // pred_fallthru
        _
      %p597 = scmp.eq.s32.totalorder %s23, 1
      // Predicated region
      $region57: #{cbatchnorm1d.1} parent=43 // pred_check
        %p598 = pneg %p597
      $region58: #{cbatchnorm1d.1} parent=43 // pred_check_branch
        %600 = sbr.rel (%p598) target = $region60
      $region59: #{cbatchnorm1d.1} parent=43 // pred_region
        %v601 = vld [vmem:[%s333] sm:$0xff]
        %v602 = vld [vmem:[%s333 + $0x8] sm:$0xff]
        %v603 = vld [vmem:[%s333 + $0x10] sm:$0xff]
        %v604 = vld [vmem:[%s333 + $0x18] sm:$0xff]
        %v605 = vld [vmem:[%s333 + $0x20] sm:$0xff]
        %v606 = vld [vmem:[%s333 + $0x28] sm:$0xff]
        %v607 = vld [vmem:[%s333 + $0x30] sm:$0xff]
        %v608 = vld [vmem:[%s333 + $0x38] sm:$0xff]
        %v609 = vld [vmem:[#allocation2] sm:$0x3]
        %v610 = vperm.slane %v609, 0
        %v611 = vlaneseq
        %v612 = vshrl.u32 %v611, 7
        %614 = vset.pattern.permute.xlu0 %v612
        %615 = vperm.xlu0 %614, %v610
        %v616 = vpop.permute.xlu0 %615
        %v617 = vlaneseq
        %v618 = vshrl.u32 %v617, 7
        %v619 = vadd.s32 %v618, 8
        %620 = vset.pattern.permute.xlu0 %v619
        %621 = vperm.xlu0 %620, %v610
        %v622 = vpop.permute.xlu0 %621
        %v623 = vlaneseq
        %v624 = vshrl.u32 %v623, 7
        %v625 = vadd.s32 %v624, 16
        %626 = vset.pattern.permute.xlu0 %v625
        %627 = vperm.xlu0 %626, %v610
        %v628 = vpop.permute.xlu0 %627
        %v629 = vlaneseq
        %v630 = vshrl.u32 %v629, 7
        %v631 = vadd.s32 %v630, 24
        %632 = vset.pattern.permute.xlu0 %v631
        %633 = vperm.xlu0 %632, %v610
        %v634 = vpop.permute.xlu0 %633
        %v635 = vperm.slane %v609, 1
        %v636 = vlaneseq
        %v637 = vshrl.u32 %v636, 7
        %639 = vset.pattern.permute.xlu0 %v637
        %640 = vperm.xlu0 %639, %v635
        %v641 = vpop.permute.xlu0 %640
        %v642 = vlaneseq
        %v643 = vshrl.u32 %v642, 7
        %v644 = vadd.s32 %v643, 8
        %645 = vset.pattern.permute.xlu0 %v644
        %646 = vperm.xlu0 %645, %v635
        %v647 = vpop.permute.xlu0 %646
        %v648 = vlaneseq
        %v649 = vshrl.u32 %v648, 7
        %v650 = vadd.s32 %v649, 16
        %651 = vset.pattern.permute.xlu0 %v650
        %652 = vperm.xlu0 %651, %v635
        %v653 = vpop.permute.xlu0 %652
        %v654 = vlaneseq
        %v655 = vshrl.u32 %v654, 7
        %v656 = vadd.s32 %v655, 24
        %657 = vset.pattern.permute.xlu0 %v656
        %658 = vperm.xlu0 %657, %v635
        %v659 = vpop.permute.xlu0 %658
        %v660 = vld [vmem:[#allocation3] sm:$0x3]
        %v661 = vperm.slane %v660, 0
        %v662 = vlaneseq
        %v663 = vshrl.u32 %v662, 7
        %665 = vset.pattern.permute.xlu0 %v663
        %666 = vperm.xlu0 %665, %v661
        %v667 = vpop.permute.xlu0 %666
        %v668 = vlaneseq
        %v669 = vshrl.u32 %v668, 7
        %v670 = vadd.s32 %v669, 8
        %671 = vset.pattern.permute.xlu0 %v670
        %672 = vperm.xlu0 %671, %v661
        %v673 = vpop.permute.xlu0 %672
        %v674 = vlaneseq
        %v675 = vshrl.u32 %v674, 7
        %v676 = vadd.s32 %v675, 16
        %677 = vset.pattern.permute.xlu0 %v676
        %678 = vperm.xlu0 %677, %v661
        %v679 = vpop.permute.xlu0 %678
        %v680 = vlaneseq
        %v681 = vshrl.u32 %v680, 7
        %v682 = vadd.s32 %v681, 24
        %683 = vset.pattern.permute.xlu0 %v682
        %684 = vperm.xlu0 %683, %v661
        %v685 = vpop.permute.xlu0 %684
        %v686 = vperm.slane %v660, 1
        %v687 = vlaneseq
        %v688 = vshrl.u32 %v687, 7
        %690 = vset.pattern.permute.xlu0 %v688
        %691 = vperm.xlu0 %690, %v686
        %v692 = vpop.permute.xlu0 %691
        %v693 = vlaneseq
        %v694 = vshrl.u32 %v693, 7
        %v695 = vadd.s32 %v694, 8
        %696 = vset.pattern.permute.xlu0 %v695
        %697 = vperm.xlu0 %696, %v686
        %v698 = vpop.permute.xlu0 %697
        %v699 = vlaneseq
        %v700 = vshrl.u32 %v699, 7
        %v701 = vadd.s32 %v700, 16
        %702 = vset.pattern.permute.xlu0 %v701
        %703 = vperm.xlu0 %702, %v686
        %v704 = vpop.permute.xlu0 %703
        %v705 = vlaneseq
        %v706 = vshrl.u32 %v705, 7
        %v707 = vadd.s32 %v706, 24
        %708 = vset.pattern.permute.xlu0 %v707
        %709 = vperm.xlu0 %708, %v686
        %v710 = vpop.permute.xlu0 %709
        %v711 = vld [vmem:[#allocation4] sm:$0x3]
        %v712 = vperm.slane %v711, 0
        %v713 = vlaneseq
        %v714 = vshrl.u32 %v713, 7
        %716 = vset.pattern.permute.xlu0 %v714
        %717 = vperm.xlu0 %716, %v712
        %v718 = vpop.permute.xlu0 %717
        %v719 = vlaneseq
        %v720 = vshrl.u32 %v719, 7
        %v721 = vadd.s32 %v720, 8
        %722 = vset.pattern.permute.xlu0 %v721
        %723 = vperm.xlu0 %722, %v712
        %v724 = vpop.permute.xlu0 %723
        %v725 = vlaneseq
        %v726 = vshrl.u32 %v725, 7
        %v727 = vadd.s32 %v726, 16
        %728 = vset.pattern.permute.xlu0 %v727
        %729 = vperm.xlu0 %728, %v712
        %v730 = vpop.permute.xlu0 %729
        %v731 = vlaneseq
        %v732 = vshrl.u32 %v731, 7
        %v733 = vadd.s32 %v732, 24
        %734 = vset.pattern.permute.xlu0 %v733
        %735 = vperm.xlu0 %734, %v712
        %v736 = vpop.permute.xlu0 %735
        %v737 = vperm.slane %v711, 1
        %v738 = vlaneseq
        %v739 = vshrl.u32 %v738, 7
        %741 = vset.pattern.permute.xlu0 %v739
        %742 = vperm.xlu0 %741, %v737
        %v743 = vpop.permute.xlu0 %742
        %v744 = vlaneseq
        %v745 = vshrl.u32 %v744, 7
        %v746 = vadd.s32 %v745, 8
        %747 = vset.pattern.permute.xlu0 %v746
        %748 = vperm.xlu0 %747, %v737
        %v749 = vpop.permute.xlu0 %748
        %v750 = vlaneseq
        %v751 = vshrl.u32 %v750, 7
        %v752 = vadd.s32 %v751, 16
        %753 = vset.pattern.permute.xlu0 %v752
        %754 = vperm.xlu0 %753, %v737
        %v755 = vpop.permute.xlu0 %754
        %v756 = vlaneseq
        %v757 = vshrl.u32 %v756, 7
        %v758 = vadd.s32 %v757, 24
        %759 = vset.pattern.permute.xlu0 %v758
        %760 = vperm.xlu0 %759, %v737
        %v761 = vpop.permute.xlu0 %760
        %v762 = vld [vmem:[#allocation5] sm:$0x3]
        %v763 = vperm.slane %v762, 0
        %v764 = vlaneseq
        %v765 = vshrl.u32 %v764, 7
        %767 = vset.pattern.permute.xlu0 %v765
        %768 = vperm.xlu0 %767, %v763
        %v769 = vpop.permute.xlu0 %768
        %v770 = vlaneseq
        %v771 = vshrl.u32 %v770, 7
        %v772 = vadd.s32 %v771, 8
        %773 = vset.pattern.permute.xlu0 %v772
        %774 = vperm.xlu0 %773, %v763
        %v775 = vpop.permute.xlu0 %774
        %v776 = vlaneseq
        %v777 = vshrl.u32 %v776, 7
        %v778 = vadd.s32 %v777, 16
        %779 = vset.pattern.permute.xlu0 %v778
        %780 = vperm.xlu0 %779, %v763
        %v781 = vpop.permute.xlu0 %780
        %v782 = vlaneseq
        %v783 = vshrl.u32 %v782, 7
        %v784 = vadd.s32 %v783, 24
        %785 = vset.pattern.permute.xlu0 %v784
        %786 = vperm.xlu0 %785, %v763
        %v787 = vpop.permute.xlu0 %786
        %v788 = vperm.slane %v762, 1
        %v789 = vlaneseq
        %v790 = vshrl.u32 %v789, 7
        %792 = vset.pattern.permute.xlu0 %v790
        %793 = vperm.xlu0 %792, %v788
        %v794 = vpop.permute.xlu0 %793
        %v795 = vlaneseq
        %v796 = vshrl.u32 %v795, 7
        %v797 = vadd.s32 %v796, 8
        %798 = vset.pattern.permute.xlu0 %v797
        %799 = vperm.xlu0 %798, %v788
        %v800 = vpop.permute.xlu0 %799
        %v801 = vlaneseq
        %v802 = vshrl.u32 %v801, 7
        %v803 = vadd.s32 %v802, 16
        %804 = vset.pattern.permute.xlu0 %v803
        %805 = vperm.xlu0 %804, %v788
        %v806 = vpop.permute.xlu0 %805
        %v807 = vlaneseq
        %v808 = vshrl.u32 %v807, 7
        %v809 = vadd.s32 %v808, 24
        %810 = vset.pattern.permute.xlu0 %v809
        %811 = vperm.xlu0 %810, %v788
        %v812 = vpop.permute.xlu0 %811
        %v813 = vsub.f32 %v601, %v616
        %v814 = vsub.f32 %v602, %v622
        %v815 = vsub.f32 %v603, %v628
        %v816 = vsub.f32 %v604, %v634
        %v817 = vsub.f32 %v605, %v641
        %v818 = vsub.f32 %v606, %v647
        %v819 = vsub.f32 %v607, %v653
        %v820 = vsub.f32 %v608, %v659
        %v821 = vmul.f32 %v813, %v667
        %v822 = vmul.f32 %v814, %v673
        %v823 = vmul.f32 %v815, %v679
        %v824 = vmul.f32 %v816, %v685
        %v825 = vmul.f32 %v817, %v692
        %v826 = vmul.f32 %v818, %v698
        %v827 = vmul.f32 %v819, %v704
        %v828 = vmul.f32 %v820, %v710
        %v829 = vmul.f32 %v718, %v821
        %v830 = vmul.f32 %v724, %v822
        %v831 = vmul.f32 %v730, %v823
        %v832 = vmul.f32 %v736, %v824
        %v833 = vmul.f32 %v743, %v825
        %v834 = vmul.f32 %v749, %v826
        %v835 = vmul.f32 %v755, %v827
        %v836 = vmul.f32 %v761, %v828
        %v837 = vadd.f32 %v829, %v769
        %v838 = vadd.f32 %v830, %v775
        %v839 = vadd.f32 %v831, %v781
        %v840 = vadd.f32 %v832, %v787
        %v841 = vadd.f32 %v833, %v794
        %v842 = vadd.f32 %v834, %v800
        %v843 = vadd.f32 %v835, %v806
        %v844 = vadd.f32 %v836, %v812
        %vm845 = vcmask 130048
        %846 = vst.msk [vmem:[%s357] sm:$0xff] %vm845, %v837
        %847 = vst.msk [vmem:[%s357 + $0x8] sm:$0xff] %vm845, %v838
        %848 = vst.msk [vmem:[%s357 + $0x10] sm:$0xff] %vm845, %v839
        %849 = vst.msk [vmem:[%s357 + $0x18] sm:$0xff] %vm845, %v840
        %850 = vst.msk [vmem:[%s357 + $0x20] sm:$0xff] %vm845, %v841
        %851 = vst.msk [vmem:[%s357 + $0x28] sm:$0xff] %vm845, %v842
        %852 = vst.msk [vmem:[%s357 + $0x30] sm:$0xff] %vm845, %v843
        %853 = vst.msk [vmem:[%s357 + $0x38] sm:$0xff] %vm845, %v844
      $region60: #{cbatchnorm1d.1} parent=43 // pred_fallthru
        _
      %s854 = smul.u32 %s24, %s23
      %s855 = smul.u32 4, %s22
      %p856 = scmp.lt.s32.totalorder %s855, 3
      %s857 = scalar_select %p856, %s855, 3
      %p858 = scmp.lt.s32.totalorder %s854, 0
      %s859 = scalar_select %p858, %s854, 0
      %s860 = sadd.s32 %s859, %s857
      %s861 = smul.addr %s860, 8
      %s862 = scalar_lea.vmem %s6, %s861
      // Predicated region
      $region61: #{cbatchnorm1d.1} parent=43 // pred_check
        %p863 = pneg %p211
      $region62: #{cbatchnorm1d.1} parent=43 // pred_check_branch
        %865 = sbr.rel (%p863) target = $region64
      $region63: #{cbatchnorm1d.1} parent=43 // pred_region
        %s866 = smul.u32 %s24, %s23
        %s867 = smul.u32 4, %s22
      $region64: #{cbatchnorm1d.1} parent=43 // pred_fallthru
        _
    $region44: #{cbatchnorm1d.1} parent=5 // pred_fallthru
      _
    %p868 = scmp.le.s32.totalorder 2, %s12
    // Predicated region
    $region65: #{cbatchnorm1d.1} parent=5 // pred_check
      %p869 = pneg %p868
    $region66: #{cbatchnorm1d.1} parent=5 // pred_check_branch
      %871 = sbr.rel (%p869) target = $region68
    $region67: #{cbatchnorm1d.1} parent=5 // pred_region
      %s872 = ssub.s32 %s12, 2
      // Predicated region
      $region69: #{cbatchnorm1d.1} parent=67 // pred_check
        %p873 = pneg %p217
      $region70: #{cbatchnorm1d.1} parent=67 // pred_check_branch
        %875 = sbr.rel (%p873) target = $region72
      $region71: #{cbatchnorm1d.1} parent=67 // pred_region
        %s876 = smul.u32 %s27, %s26
        %s877 = smul.u32 4, %s25
        %p878 = scmp.lt.s32.totalorder %s877, 3
        %s879 = scalar_select %p878, %s877, 3
        %p880 = scmp.lt.s32.totalorder %s876, 0
        %s881 = scalar_select %p880, %s876, 0
        %s882 = sadd.s32 %s881, %s879
        %s883 = smul.addr %s882, 8
        %s884 = scalar_lea.vmem %s6, %s883
      $region72: #{cbatchnorm1d.1} parent=67 // pred_fallthru
        _
    $region68: #{cbatchnorm1d.1} parent=5 // pred_fallthru
      _
  $region6: #{cbatchnorm1d.1} parent=0 // loop_footer
    %s16 = sadd.s32 1, %s12
  $region7: #{cbatchnorm1d.1} parent=0 // loop_footer_branch
    %11 = sbr.rel target = $region3
  $region8: #{cbatchnorm1d.1} parent=0 // loop_exit
    _

</llo_original>
